<compile_context>
chip_gen: v6e
topology: v6e:2x2x1
jax: 0.10.0
libtpu: 0.0.40
codegen_flags: <defaults>
</compile_context>

<pallas_src>
import functools
import math

import jax
import jax.numpy as jnp
from jax import lax
from jax.experimental import pallas as pl
from jax.experimental.pallas import tpu as pltpu

LANE = 128

_CORE_PARALLEL = getattr(pltpu, "CORE_PARALLEL", "parallel")
_ARBITRARY = getattr(pltpu, "ARBITRARY", "arbitrary")


def _round_up(x, m):
    return -(-x // m) * m


def _default_num_cores():
    """2 only on v7x (2 TensorCores/chip); 1 everywhere else."""
    try:
        kind = jax.devices()[0].device_kind.lower()
    except Exception:
        return 1
    return 2 if ("v7" in kind or "7x" in kind) else 1


def _multi_scale_loss_kernel(*refs, num_scales, half_weights, rows_valid,
                             steps, two_axes, need_row_mask):
    """Grid = (core, tile) or (tile,).  Output block (16, LANE) per core:
         rows 0:8  -> weighted masked SmoothL1 partial sums (vreg-shaped)
         rows 8:16 -> masked-element count partial sums (vreg-shaped)
    """
    gt_ref = refs[0]
    pred_refs = refs[1:1 + num_scales]
    out_ref = refs[1 + num_scales]

    if two_axes:
        tile_i = pl.program_id(1)                    # reduction ("arbitrary") axis
        blk = pl.program_id(0) * steps + tile_i      # global (unclamped) block id
    else:
        tile_i = pl.program_id(0)
        blk = tile_i

    @pl.when(tile_i == 0)
    def _init():
        out_ref[...] = jnp.zeros_like(out_ref)

    tile_rows = gt_ref.shape[0]                      # static; multiple of 8
    groups = tile_rows // 8

    if need_row_mask:
        # Hoisted out of the loop (JAX does not CSE broadcasts).
        row_iota = lax.broadcasted_iota(jnp.int32, (8, LANE), 0)
        row_base = blk * tile_rows

    def body(g, carry):
        loss_acc, cnt_acc = carry
        r0 = pl.multiple_of(g * 8, 8)
        gt = gt_ref[pl.ds(r0, 8), :].astype(jnp.float32)        # one vreg slice
        mask = (gt > 0.0) & (gt < 192.0)
        if need_row_mask:
            # Mandatory when tiles run past the real row count: those VMEM rows
            # hold unspecified data that could land inside (0, 192).
            mask = mask & ((row_iota + (row_base + r0)) < rows_valid)

        lsum = jnp.zeros((8, LANE), jnp.float32)
        for s in range(num_scales):                  # static unroll over scales
            d = pred_refs[s][pl.ds(r0, 8), :].astype(jnp.float32) - gt
            ad = jnp.abs(d)
            t = jnp.minimum(ad, 1.0)
            # SmoothL1 (beta=1), exact & branch-free:
            #   0.5*t*(2|d|-t) = 0.5*d^2 if |d|<1 else |d|-0.5
            lsum = lsum + half_weights[s] * (t * (ad + ad - t))

        loss_acc = loss_acc + jnp.where(mask, lsum, 0.0)
        cnt_acc = cnt_acc + mask.astype(jnp.float32)
        return loss_acc, cnt_acc

    zeros = jnp.zeros((8, LANE), jnp.float32)
    loss_acc, cnt_acc = lax.fori_loop(0, groups, body, (zeros, zeros),
                                      unroll=min(8, groups))

    # Accumulator stays vreg-shaped; no cross-lane/sublane reduce in the kernel.
    out_ref[0:8, :] += loss_acc
    out_ref[8:16, :] += cnt_acc


def multi_scale_loss(disp_infer_list, disp_gt, weights, *, tile_r=2048, num_cores=None):
    """Pallas implementation of MultiScaleLoss.forward for a list of predictions."""
    num_scales = len(disp_infer_list)
    assert len(weights) == num_scales

    if num_cores is None:
        num_cores = _default_num_cores()
    num_cores = max(1, int(num_cores))

    n = math.prod(disp_gt.shape)
    rows = -(-n // LANE)

    # Sublane granularity from the narrowest input dtype (f32:8, bf16:16, int8:32).
    min_itemsize = min(jnp.dtype(x.dtype).itemsize for x in (disp_gt, *disp_infer_list))
    sub = 8 * (4 // min_itemsize)

    tile_eff = min(_round_up(tile_r, sub), _round_up(rows, sub))
    rows_padded = max(rows, tile_eff)            # array must hold >= 1 full block
    pad = rows_padded * LANE - n                 # 0 for lane-aligned, big-enough inputs

    def prep(x):
        flat = x.reshape(-1)                     # no-copy reshape
        if pad:
            # TODO(synk): only hit when numel % 128 != 0 (or input < one tile);
            # a 1-D block layout could avoid this full-copy pad for that case.
            flat = jnp.pad(flat, (0, pad))       # gt padded with 0 -> masked out
        return flat.reshape(rows_padded, LANE)

    gt2d = prep(disp_gt)
    preds2d = [prep(p) for p in disp_infer_list]  # separate inputs, no jnp.stack

    steps_total = -(-rows_padded // tile_eff)
    if num_cores > steps_total:
        num_cores = 1                            # too little work to split
    steps = -(-steps_total // num_cores)
    need_row_mask = (num_cores * steps * tile_eff) > rows_padded

    if num_cores > 1:
        # Clamp so no block index is fully out of range; duplicated reads (if
        # any) contribute zero because the in-kernel global-row mask uses the
        # UNCLAMPED block id.
        last = steps_total - 1

        def in_map(c, i):
            return (jnp.minimum(c * steps + i, last), 0)

        out_spec = pl.BlockSpec((16, LANE), lambda c, i: (c, 0))
        grid = (num_cores, steps)
        dims = (_CORE_PARALLEL, _ARBITRARY)
    else:
        def in_map(i):
            return (i, 0)

        out_spec = pl.BlockSpec((16, LANE), lambda i: (0, 0))
        grid = (steps,)
        dims = (_ARBITRARY,)

    # Explicit VMEM budget: double-buffered input blocks + headroom.
    in_block_bytes = sum(2 * tile_eff * LANE * jnp.dtype(x.dtype).itemsize
                         for x in (disp_gt, *disp_infer_list))
    vmem_limit = int(in_block_bytes + (8 << 20))

    kernel = functools.partial(
        _multi_scale_loss_kernel,
        num_scales=num_scales,
        half_weights=tuple(0.5 * float(w) for w in weights),
        rows_valid=rows_padded,
        steps=steps,
        two_axes=(num_cores > 1),
        need_row_mask=need_row_mask,
    )

    out = pl.pallas_call(
        kernel,
        out_shape=jax.ShapeDtypeStruct((num_cores * 16, LANE), jnp.float32),
        grid_spec=pltpu.PrefetchScalarGridSpec(
            num_scalar_prefetch=0,
            grid=grid,
            in_specs=[pl.BlockSpec((tile_eff, LANE), in_map)
                      for _ in range(num_scales + 1)],
            out_specs=out_spec,
        ),
        compiler_params=pltpu.CompilerParams(
            dimension_semantics=dims,
            vmem_limit_bytes=vmem_limit,
        ),
    )(gt2d, *preds2d)

    # Tiny final reduction + single division outside the kernel.
    out = out.reshape(num_cores, 2, 8, LANE)
    total = jnp.sum(out[:, 0])
    count = jnp.sum(out[:, 1])
    # NOTE: count == 0 yields NaN, same as the PyTorch reference.
    return total / count


def _reference_loss(disp_infer_list, disp_gt, weights):
    """Pure-JAX reference matching the PyTorch forward."""
    mask = (disp_gt < 192.0) & (disp_gt > 0.0)
    count = jnp.sum(mask.astype(jnp.float32))
    total = jnp.float32(0.0)
    for w_i, pred in zip(weights, disp_infer_list):
        d = pred - disp_gt
        ad = jnp.abs(d)
        elem = jnp.where(ad < 1.0, 0.5 * d * d, ad - 0.5)
        total = total + jnp.float32(w_i) * jnp.sum(jnp.where(mask, elem, 0.0)) / count
    return total


if __name__ == "__main__":
    # Deterministic "parameters" from the module __init__: scales / weights.
    scales = 3
    weights = [0.5, 0.7, 1.0]

    def make_case(key, shape):
        k_gt, *k_preds = jax.random.split(key, scales + 1)
        # Ground truth: mix of valid (0, 192) and invalid (<=0 or >=192) values.
        disp_gt = jax.random.uniform(k_gt, shape, jnp.float32, minval=-20.0, maxval=240.0)
        # Predictions: gt + noise (small & large -> both SmoothL1 branches).
        disp_infer = [
            disp_gt + jax.random.normal(k, shape, jnp.float32) * (0.5 + 1.5 * i)
            for i, k in enumerate(k_preds)
        ]
        return disp_infer, disp_gt

    # Exercise every static specialization of the kernel:
    #   (2,16,16): lane-aligned, single full tile (no row mask, no pad)
    #   (2,20,32) + tile_r=8: ragged last tile -> in-kernel global-row mask path
    #   (2,13,19): numel % 128 != 0 -> tiny tail-pad path
    cases = [
        ((2, 16, 16), {}),
        ((2, 20, 32), dict(tile_r=8)),
        ((2, 13, 19), {}),
    ]

    key = jax.random.PRNGKey(0)
    for shape, kwargs in cases:
        key, sub = jax.random.split(key)
        disp_infer, disp_gt = make_case(sub, shape)
        loss = jax.block_until_ready(multi_scale_loss(disp_infer, disp_gt, weights, **kwargs))
        ref = _reference_loss(disp_infer, disp_gt, weights)
        assert jnp.allclose(loss, ref, rtol=1e-5, atol=1e-5), (shape, loss, ref)

    print("KERNEL_OK")
</pallas_src>

<mosaic_0001>
module attributes {stable_mosaic.version = 11 : i64} {
  func.func @_multi_scale_loss_kernel(%arg0: i32, %arg1: memref<8x128xf32, #tpu.memory_space<vmem>>, %arg2: memref<8x128xf32, #tpu.memory_space<vmem>>, %arg3: memref<8x128xf32, #tpu.memory_space<vmem>>, %arg4: memref<8x128xf32, #tpu.memory_space<vmem>>, %arg5: memref<16x128xf32, #tpu.memory_space<vmem>>) attributes {dimension_semantics = [#tpu.dimension_semantics<arbitrary>], iteration_bounds = array<i64: 1>, scalar_prefetch = 0 : i64, scratch_operands = 0 : i64, tpu.core_type = #tpu.core_type<tc>, window_params = [{transform_indices = @transform_0, window_bounds = array<i64: 8, 128>}, {transform_indices = @transform_1, window_bounds = array<i64: 8, 128>}, {transform_indices = @transform_2, window_bounds = array<i64: 8, 128>}, {transform_indices = @transform_3, window_bounds = array<i64: 8, 128>}, {pipeline_mode = #tpu.pipeline_mode<synchronous>, transform_indices = @transform_4, window_bounds = array<i64: 16, 128>}]} {
    %c0_i32 = arith.constant 0 : i32
    %0 = arith.cmpi eq, %arg0, %c0_i32 : i32
    %1 = arith.extui %0 : i1 to i32
    %c0_i32_0 = arith.constant 0 : i32
    %2 = arith.cmpi ne, %1, %c0_i32_0 : i32
    scf.if %2 {
      %cst_22 = arith.constant 0.000000e+00 : f32
      %62 = vector.broadcast %cst_22 : f32 to vector<16x128xf32>
      %c0_23 = arith.constant 0 : index
      %c0_24 = arith.constant 0 : index
      %63 = vector.load %arg5[%c0_23, %c0_24] : memref<16x128xf32, #tpu.memory_space<vmem>>, vector<16x128xf32>
      tpu.vector_store %arg5[%c0_23, %c0_24], %62 {strides = array<i32>} : memref<16x128xf32, #tpu.memory_space<vmem>>, vector<16x128xf32>,
    } else {
    }
    %cst = arith.constant 0.000000e+00 : f32
    %3 = vector.broadcast %cst : f32 to vector<8x128xf32>
    %c0_i32_1 = arith.constant 0 : i32
    %c8_i32 = arith.constant 8 : i32
    %4 = arith.muli %c0_i32_1, %c8_i32 : i32
    %5 = tpu.assume_multiple %4, 8 : i32
    %6 = arith.index_cast %5 : i32 to index
    %c0 = arith.constant 0 : index
    %7 = vector.load %arg1[%6, %c0] : memref<8x128xf32, #tpu.memory_space<vmem>>, vector<8x128xf32>
    %cst_2 = arith.constant 0.000000e+00 : f32
    %8 = vector.broadcast %cst_2 : f32 to vector<8x128xf32>
    %9 = arith.cmpf ogt, %7, %8 : vector<8x128xf32>
    %cst_3 = arith.constant 1.920000e+02 : f32
    %10 = vector.broadcast %cst_3 : f32 to vector<8x128xf32>
    %11 = arith.cmpf olt, %7, %10 : vector<8x128xf32>
    %12 = arith.andi %9, %11 : vector<8x128xi1>
    %cst_4 = arith.constant 0.000000e+00 : f32
    %13 = vector.broadcast %cst_4 : f32 to vector<8x128xf32>
    %14 = arith.index_cast %5 : i32 to index
    %c0_5 = arith.constant 0 : index
    %15 = vector.load %arg2[%14, %c0_5] : memref<8x128xf32, #tpu.memory_space<vmem>>, vector<8x128xf32>
    %16 = arith.subf %15, %7 : vector<8x128xf32>
    %17 = math.absf %16 : vector<8x128xf32>
    %cst_6 = arith.constant 1.000000e+00 : f32
    %18 = vector.broadcast %cst_6 : f32 to vector<8x128xf32>
    %19 = arith.minimumf %17, %18 : vector<8x128xf32>
    %20 = arith.addf %17, %17 : vector<8x128xf32>
    %21 = arith.subf %20, %19 : vector<8x128xf32>
    %22 = arith.mulf %19, %21 : vector<8x128xf32>
    %cst_7 = arith.constant 2.500000e-01 : f32
    %23 = vector.broadcast %cst_7 : f32 to vector<8x128xf32>
    %24 = arith.mulf %23, %22 : vector<8x128xf32>
    %25 = arith.addf %13, %24 : vector<8x128xf32>
    %26 = arith.index_cast %5 : i32 to index
    %c0_8 = arith.constant 0 : index
    %27 = vector.load %arg3[%26, %c0_8] : memref<8x128xf32, #tpu.memory_space<vmem>>, vector<8x128xf32>
    %28 = arith.subf %27, %7 : vector<8x128xf32>
    %29 = math.absf %28 : vector<8x128xf32>
    %cst_9 = arith.constant 1.000000e+00 : f32
    %30 = vector.broadcast %cst_9 : f32 to vector<8x128xf32>
    %31 = arith.minimumf %29, %30 : vector<8x128xf32>
    %32 = arith.addf %29, %29 : vector<8x128xf32>
    %33 = arith.subf %32, %31 : vector<8x128xf32>
    %34 = arith.mulf %31, %33 : vector<8x128xf32>
    %cst_10 = arith.constant 3.500000e-01 : f32
    %35 = vector.broadcast %cst_10 : f32 to vector<8x128xf32>
    %36 = arith.mulf %35, %34 : vector<8x128xf32>
    %37 = arith.addf %25, %36 : vector<8x128xf32>
    %38 = arith.index_cast %5 : i32 to index
    %c0_11 = arith.constant 0 : index
    %39 = vector.load %arg4[%38, %c0_11] : memref<8x128xf32, #tpu.memory_space<vmem>>, vector<8x128xf32>
    %40 = arith.subf %39, %7 : vector<8x128xf32>
    %41 = math.absf %40 : vector<8x128xf32>
    %cst_12 = arith.constant 1.000000e+00 : f32
    %42 = vector.broadcast %cst_12 : f32 to vector<8x128xf32>
    %43 = arith.minimumf %41, %42 : vector<8x128xf32>
    %44 = arith.addf %41, %41 : vector<8x128xf32>
    %45 = arith.subf %44, %43 : vector<8x128xf32>
    %46 = arith.mulf %43, %45 : vector<8x128xf32>
    %cst_13 = arith.constant 5.000000e-01 : f32
    %47 = vector.broadcast %cst_13 : f32 to vector<8x128xf32>
    %48 = arith.mulf %47, %46 : vector<8x128xf32>
    %49 = arith.addf %37, %48 : vector<8x128xf32>
    %cst_14 = arith.constant 0.000000e+00 : f32
    %50 = vector.broadcast %cst_14 : f32 to vector<8x128xf32>
    %51 = arith.select %12, %49, %50 : vector<8x128xi1>, vector<8x128xf32>
    %52 = arith.addf %3, %51 : vector<8x128xf32>
    %53 = arith.extui %12 : vector<8x128xi1> to vector<8x128xi32>
    %54 = arith.sitofp %53 : vector<8x128xi32> to vector<8x128xf32>
    %55 = arith.addf %3, %54 : vector<8x128xf32>
    %c1_i32 = arith.constant 1 : i32
    %c0_15 = arith.constant 0 : index
    %c0_16 = arith.constant 0 : index
    %56 = vector.load %arg5[%c0_15, %c0_16] : memref<16x128xf32, #tpu.memory_space<vmem>>, vector<8x128xf32>
    %57 = arith.addf %56, %52 : vector<8x128xf32>
    %c0_17 = arith.constant 0 : index
    %c0_18 = arith.constant 0 : index
    %58 = vector.load %arg5[%c0_17, %c0_18] : memref<16x128xf32, #tpu.memory_space<vmem>>, vector<8x128xf32>
    tpu.vector_store %arg5[%c0_17, %c0_18], %57 {strides = array<i32>} : memref<16x128xf32, #tpu.memory_space<vmem>>, vector<8x128xf32>,
    %c8 = arith.constant 8 : index
    %c0_19 = arith.constant 0 : index
    %59 = vector.load %arg5[%c8, %c0_19] : memref<16x128xf32, #tpu.memory_space<vmem>>, vector<8x128xf32>
    %60 = arith.addf %59, %55 : vector<8x128xf32>
    %c8_20 = arith.constant 8 : index
    %c0_21 = arith.constant 0 : index
    %61 = vector.load %arg5[%c8_20, %c0_21] : memref<16x128xf32, #tpu.memory_space<vmem>>, vector<8x128xf32>
    tpu.vector_store %arg5[%c8_20, %c0_21], %60 {strides = array<i32>} : memref<16x128xf32, #tpu.memory_space<vmem>>, vector<8x128xf32>,
    return
  }
  func.func @transform_0(%arg0: i32) -> (i32, i32) {
    %c0_i32 = arith.constant 0 : i32
    %c0_i32_0 = arith.constant 0 : i32
    return %arg0, %c0_i32 : i32, i32
  }
  func.func @transform_1(%arg0: i32) -> (i32, i32) {
    %c0_i32 = arith.constant 0 : i32
    %c0_i32_0 = arith.constant 0 : i32
    return %arg0, %c0_i32 : i32, i32
  }
  func.func @transform_2(%arg0: i32) -> (i32, i32) {
    %c0_i32 = arith.constant 0 : i32
    %c0_i32_0 = arith.constant 0 : i32
    return %arg0, %c0_i32 : i32, i32
  }
  func.func @transform_3(%arg0: i32) -> (i32, i32) {
    %c0_i32 = arith.constant 0 : i32
    %c0_i32_0 = arith.constant 0 : i32
    return %arg0, %c0_i32 : i32, i32
  }
  func.func @transform_4(%arg0: i32) -> (i32, i32) {
    %c0_i32 = arith.constant 0 : i32
    %c0_i32_0 = arith.constant 0 : i32
    %c0_i32_1 = arith.constant 0 : i32
    return %c0_i32, %c0_i32_0 : i32, i32
  }
}

</mosaic_0001>

<llo_original>
// kernel: tpu_custom_call.1
$region0: #{tpu_custom_call.1}
  #allocation0 [shape = 'u32[]', space=smem, size = 0x4, offset = 0x4, fixed_abs, tag = 'smem constant byte address 0x4 - core index']
  #allocation1 [shape = 'u32[144,128]{1,0:T(1,128)}', space=vmem, size = 0x12000, scoped, tag = 'internal scratch']
  %s0 = inlined_call_operand.hbm [shape: f32[8,128], index: 0, kind: input, shape index: {}]
  %s1 = inlined_call_operand.hbm [shape: f32[8,128], index: 1, kind: input, shape index: {}]
  %s2 = inlined_call_operand.hbm [shape: f32[8,128], index: 2, kind: input, shape index: {}]
  %s3 = inlined_call_operand.hbm [shape: f32[8,128], index: 3, kind: input, shape index: {}]
  %s4 = inlined_call_operand.hbm [shape: f32[16,128], index: 4, kind: output, shape index: {}]
  %s5 = sld [smem:[#allocation0]]
  $region46: #{tpu_custom_call.1} parent=0
    _
  %s7 = ssub.s32 1, %s5
  %s8 = scalar_select 0, %s7, %s5
  $region1: #{tpu_custom_call.1} parent=0
    #allocation2 [shape = 'u8[4096]{0}', space=vmem, size = 0x1000, scoped, tag = 'input window, operand 0, single buffered']
    #allocation3 [shape = 's32[1]{0}', space=sflag, size = 0x4, scoped, tag = 'scoped memory for tpu_custom_call.1']
    #allocation4 [shape = 's32[1]{0}', space=sflag, size = 0x4, scoped, tag = 'scoped memory for tpu_custom_call.1']
    #allocation5 [shape = 'u8[4096]{0}', space=vmem, size = 0x1000, scoped, tag = 'input window, operand 1, single buffered']
    #allocation6 [shape = 's32[1]{0}', space=sflag, size = 0x4, scoped, tag = 'scoped memory for tpu_custom_call.1']
    #allocation7 [shape = 'u8[4096]{0}', space=vmem, size = 0x1000, scoped, tag = 'input window, operand 2, single buffered']
    #allocation8 [shape = 'u8[4096]{0}', space=vmem, size = 0x1000, scoped, tag = 'input window, operand 3, single buffered']
    #allocation9 [shape = 's32[1]{0}', space=sflag, size = 0x4, scoped, tag = 'scoped memory for tpu_custom_call.1']
    #allocation10 [shape = 'u8[8192]{0}', space=vmem, size = 0x2000, scoped, tag = 'output window, operand 0, single buffered']
    %9 = vsyncpa [#allocation3], 0
    %10 = vsyncpa [#allocation6], 0
    %11 = vsyncpa [#allocation9], 0
    %12 = vsyncpa [#allocation4], 0
    // Predicated region
    $region2: #{tpu_custom_call.1} parent=1 // pred_check
      _
    $region3: #{tpu_custom_call.1} parent=1 // pred_check_branch
      %14 = sbr.rel (0) target = $region5
    $region4: #{tpu_custom_call.1} parent=1 // pred_region
      %s16 = ssub.s32 128, 128
      %17 = vsyncadd [#allocation3], %s16
      %s19 = sshll.u32 [#allocation2], 4
      %s20 = int_to_ptr.vmem [resolvable:$true] %s19
      %22 = dma.hbm_to_vmem [thread:$0]  %s0, 128, %s20, [#allocation3]
    $region5: #{tpu_custom_call.1} parent=1 // pred_fallthru
      _
    // Predicated region
    $region6: #{tpu_custom_call.1} parent=1 // pred_check
      _
    $region7: #{tpu_custom_call.1} parent=1 // pred_check_branch
      %24 = sbr.rel (0) target = $region9
    $region8: #{tpu_custom_call.1} parent=1 // pred_region
      %s26 = ssub.s32 128, 128
      %27 = vsyncadd [#allocation6], %s26
      %s29 = sshll.u32 [#allocation5], 4
      %s30 = int_to_ptr.vmem [resolvable:$true] %s29
      %32 = dma.hbm_to_vmem [thread:$0]  %s1, 128, %s30, [#allocation6]
    $region9: #{tpu_custom_call.1} parent=1 // pred_fallthru
      _
    // Predicated region
    $region10: #{tpu_custom_call.1} parent=1 // pred_check
      _
    $region11: #{tpu_custom_call.1} parent=1 // pred_check_branch
      %34 = sbr.rel (0) target = $region13
    $region12: #{tpu_custom_call.1} parent=1 // pred_region
      %s36 = ssub.s32 128, 128
      %37 = vsyncadd [#allocation6], %s36
      %s39 = sshll.u32 [#allocation7], 4
      %s40 = int_to_ptr.vmem [resolvable:$true] %s39
      %42 = dma.hbm_to_vmem [thread:$0]  %s2, 128, %s40, [#allocation6]
    $region13: #{tpu_custom_call.1} parent=1 // pred_fallthru
      _
    // Predicated region
    $region14: #{tpu_custom_call.1} parent=1 // pred_check
      _
    $region15: #{tpu_custom_call.1} parent=1 // pred_check_branch
      %44 = sbr.rel (0) target = $region17
    $region16: #{tpu_custom_call.1} parent=1 // pred_region
      %s46 = ssub.s32 128, 128
      %47 = vsyncadd [#allocation9], %s46
      %s49 = sshll.u32 [#allocation8], 4
      %s50 = int_to_ptr.vmem [resolvable:$true] %s49
      %52 = dma.hbm_to_vmem [thread:$0]  %s3, 128, %s50, [#allocation9]
    $region17: #{tpu_custom_call.1} parent=1 // pred_fallthru
      _
    // Predicated region
    $region18: #{tpu_custom_call.1} parent=1 // pred_check
      _
    $region19: #{tpu_custom_call.1} parent=1 // pred_check_branch
      %54 = sbr.rel (0) target = $region21
    $region20: #{tpu_custom_call.1} parent=1 // pred_region
      %55 = dma.done [#allocation3], 128
    $region21: #{tpu_custom_call.1} parent=1 // pred_fallthru
      _
    // Predicated region
    $region22: #{tpu_custom_call.1} parent=1 // pred_check
      _
    $region23: #{tpu_custom_call.1} parent=1 // pred_check_branch
      %57 = sbr.rel (0) target = $region25
    $region24: #{tpu_custom_call.1} parent=1 // pred_region
      %58 = dma.done [#allocation6], 128
    $region25: #{tpu_custom_call.1} parent=1 // pred_fallthru
      _
    // Predicated region
    $region26: #{tpu_custom_call.1} parent=1 // pred_check
      _
    $region27: #{tpu_custom_call.1} parent=1 // pred_check_branch
      %60 = sbr.rel (0) target = $region29
    $region28: #{tpu_custom_call.1} parent=1 // pred_region
      %61 = dma.done [#allocation6], 128
    $region29: #{tpu_custom_call.1} parent=1 // pred_fallthru
      _
    // Predicated region
    $region30: #{tpu_custom_call.1} parent=1 // pred_check
      _
    $region31: #{tpu_custom_call.1} parent=1 // pred_check_branch
      %63 = sbr.rel (0) target = $region33
    $region32: #{tpu_custom_call.1} parent=1 // pred_region
      %64 = dma.done [#allocation9], 128
    $region33: #{tpu_custom_call.1} parent=1 // pred_fallthru
      _
    %p65 = scmp.eq.s32.totalorder 0, 0
    // Predicated region
    $region34: #{tpu_custom_call.1} parent=1 // pred_check
      %p66 = pneg %p65
    $region35: #{tpu_custom_call.1} parent=1 // pred_check_branch
      %68 = sbr.rel (%p66) target = $region37
    $region36: #{tpu_custom_call.1} parent=1 // pred_region
      %69 = vst [vmem:[#allocation10] sm:$0xff] 0.0
      %70 = vst [vmem:[#allocation10 + $0x8] sm:$0xff] 0.0
    $region37: #{tpu_custom_call.1} parent=1 // pred_fallthru
      _
    %v71 = vld [vmem:[#allocation2] sm:$0xff]
    %vm72 = vcmp.gt.f32.partialorder %v71, 0.0
    %vm73 = vcmp.lt.f32.partialorder %v71, 192.0
    %vm74 = vmand %vm72, %vm73
    %v75 = vld [vmem:[#allocation5] sm:$0xff]
    %v76 = vsub.f32 %v75, %v71
    %v77 = vand.u32 2147483647, %v76
    %v78 = vmin.f32 %v77, 1.0
    %v79 = vadd.f32 %v77, %v77
    %v80 = vsub.f32 %v79, %v78
    %v81 = vmul.f32 %v78, %v80
    %v82 = vmul.f32 %v81, 0.25
    %v83 = vadd.f32 %v82, 0.0
    %v84 = vld [vmem:[#allocation7] sm:$0xff]
    %v85 = vsub.f32 %v84, %v71
    %v86 = vand.u32 2147483647, %v85
    %v87 = vmin.f32 %v86, 1.0
    %v88 = vadd.f32 %v86, %v86
    %v89 = vsub.f32 %v88, %v87
    %v90 = vmul.f32 %v87, %v89
    %v91 = vmul.f32 %v90, 0.35
    %v92 = vadd.f32 %v83, %v91
    %v93 = vld [vmem:[#allocation8] sm:$0xff]
    %v94 = vsub.f32 %v93, %v71
    %v95 = vand.u32 2147483647, %v94
    %v96 = vmin.f32 %v95, 1.0
    %v97 = vadd.f32 %v95, %v95
    %v98 = vsub.f32 %v97, %v96
    %v99 = vmul.f32 %v96, %v98
    %v100 = vmul.f32 %v99, 0.5
    %v101 = vadd.f32 %v92, %v100
    %v102 = vsel %vm74, %v101, 0.0
    %v103 = vadd.f32 %v102, 0.0
    %v104 = vsel %vm74, 1, 0
    %v105 = vcvt.s32.f32 %v104
    %v106 = vadd.f32 %v105, 0.0
    %v107 = vld [vmem:[#allocation10] sm:$0xff]
    %v108 = vadd.f32 %v107, %v103
    %109 = vst [vmem:[#allocation10] sm:$0xff] %v108
    %v110 = vld [vmem:[#allocation10 + $0x8] sm:$0xff]
    %v111 = vadd.f32 %v110, %v106
    %112 = vst [vmem:[#allocation10 + $0x8] sm:$0xff] %v111
    // Predicated region
    $region38: #{tpu_custom_call.1} parent=1 // pred_check
      _
    $region39: #{tpu_custom_call.1} parent=1 // pred_check_branch
      %114 = sbr.rel (0) target = $region41
    $region40: #{tpu_custom_call.1} parent=1 // pred_region
      %s116 = ssub.s32 256, 256
      %117 = vsyncadd [#allocation4], %s116
      %s118 = sshll.u32 [#allocation10], 4
      %s119 = int_to_ptr.vmem [resolvable:$true] %s118
      %124 = dma.vmem_to_hbm [thread:$0]  %s119, 256, %s4, [#allocation4], 128, 128, 8
    $region41: #{tpu_custom_call.1} parent=1 // pred_fallthru
      _
    // Predicated region
    $region42: #{tpu_custom_call.1} parent=1 // pred_check
      _
    $region43: #{tpu_custom_call.1} parent=1 // pred_check_branch
      %126 = sbr.rel (0) target = $region45
    $region44: #{tpu_custom_call.1} parent=1 // pred_region
      %127 = dma.done [#allocation4], 256
    $region45: #{tpu_custom_call.1} parent=1 // pred_fallthru
      _
    %128 = vsyncpa [#allocation3], 1
    %129 = vsyncpa [#allocation6], 1
    %130 = vsyncpa [#allocation9], 1
    %131 = vsyncpa [#allocation4], 1

</llo_original>
